<compile_context>
chip_gen: v6e
topology: v6e:2x2x1
jax: 0.10.0
libtpu: 0.0.40
codegen_flags: <defaults>
</compile_context>

<pallas_src>
import functools

import jax
import jax.numpy as jnp
from jax import lax
from jax.experimental import pallas as pl
from jax.experimental.pallas import tpu as pltpu


def _round_up(x, m):
    return ((x + m - 1) // m) * m


def _physical_vmem_bytes():
    try:
        info = pltpu.get_tpu_info()
        return int(getattr(info, "vmem_capacity_bytes", 128 << 20))
    except Exception:
        return 128 << 20


def _vmem_footprint(tm, tn, d_lane, x2_rows, out_itemsize):
    # Double-buffered windows (Pallas default), f32 inputs, lane/sublane padded.
    out_b = 2 * tm * tn * out_itemsize
    x1_b = 2 * tm * d_lane * 4
    x2_b = 2 * x2_rows * d_lane * 4
    sq1_b = 2 * tm * 128 * 4          # (tm, 1) lane-pads to (tm, 128)
    sq2_b = 2 * 8 * tn * 4            # (1, tn) sublane-pads to (8, tn)
    return out_b + x1_b + x2_b + sq1_b + sq2_b


def _gaussian_body(sq1_ref, sq2_ref, x1_ref, x2_ref, o_ref, *,
                   neg_gamma, sf2, tn, x2_resident):
    x1 = x1_ref[...]                                   # (tm, D) f32

    if x2_resident:
        # x2 lives fully in VMEM (fetched once); slice this column tile's rows.
        start = pl.multiple_of(pl.program_id(1) * tn, tn)
        x2 = x2_ref[pl.ds(start, tn), :]               # (tn, D)
    else:
        x2 = x2_ref[...]                               # (tn, D)

    # Contract on the last dim of both operands (no transpose), f32 MXU accum.
    inner = lax.dot_general(
        x1, x2,
        dimension_numbers=(((1,), (1,)), ((), ())),
        preferred_element_type=jnp.float32)

    # ||a - b||^2 = ||a||^2 + ||b||^2 - 2 a.b ; row norms precomputed in wrapper.
    sqdist = jnp.maximum(sq1_ref[...] + sq2_ref[...] - 2.0 * inner, 0.0)

    # K = sigma_f^2 * exp(-sqdist / (2 * length_scale^2))
    o_ref[...] = (sf2 * jnp.exp(sqdist * neg_gamma)).astype(o_ref.dtype)


def gaussian_kernel(x1, x2=None, length_scale=1.0, sigma_f=1.0, *,
                    tm=512, tn=2048, out_dtype=jnp.float32):
    """x1: (N, D), x2: (M, D) float32.  Returns K: (N, M) in out_dtype."""
    if x2 is None:                                     # forward(x1, x2=None)
        x2 = x1

    x1 = jnp.asarray(x1, jnp.float32)
    x2 = jnp.asarray(x2, jnp.float32)
    N, D = x1.shape
    M, D2 = x2.shape
    assert D == D2, "feature dims must match"

    # Module parameters are static scalars -> fold them as trace-time constants.
    ls = float(length_scale)
    neg_gamma = -0.5 / (ls * ls)
    sf2 = float(sigma_f) ** 2

    # Precompute row norms once (no per-tile XLU reductions / transposes).
    sq1 = jnp.sum(x1 * x1, axis=-1, keepdims=True)     # (N, 1)
    sq2 = jnp.sum(x2 * x2, axis=-1)[None, :]           # (1, M)

    out_dtype = jnp.dtype(out_dtype)
    out_itemsize = out_dtype.itemsize
    row_align = 16 if out_dtype == jnp.bfloat16 else 8

    # Clamp tiles for small problems (tm multiple of 8/16, tn multiple of 128).
    tm = max(row_align, min(int(tm), _round_up(N, row_align)))
    tm = _round_up(tm, row_align)
    tn = max(128, min(int(tn), _round_up(M, 128)))
    tn = _round_up(tn, 128)

    d_lane = _round_up(D, 128)                         # VMEM lane padding (estimate only)

    # Generation-aware VMEM budget: ~3/4 of physical (96 MiB v5e/v6e, 48 MiB v7x).
    phys = _physical_vmem_bytes()
    budget = (phys * 3) // 4

    # Shrink tiles (tiled-x2 footprint) until they fit the budget.
    while (_vmem_footprint(tm, tn, d_lane, tn, out_itemsize) > budget
           and (tn > 128 or tm > row_align)):
        if tn >= tm and tn > 128:
            tn = max(128, (tn // 2 // 128) * 128)
        elif tm > row_align:
            tm = max(row_align, (tm // 2 // row_align) * row_align)
        else:
            break

    grid_m = pl.cdiv(N, tm)
    grid_n = pl.cdiv(M, tn)
    Np = grid_m * tm
    Mp = grid_n * tn

    # Keep x2 fully VMEM-resident when it is small: removes all redundant
    # x2 HBM re-reads (otherwise x2 is re-streamed grid_m times).
    resident_cap = min(8 << 20, budget // 3)
    x2_resident = (2 * Mp * d_lane * 4 <= resident_cap and
                   _vmem_footprint(tm, tn, d_lane, Mp, out_itemsize) <= budget)

    # Pad *inputs* only (cheap: O(N*D + M*D)); output stays exactly (N, M) and
    # the ragged edge output tiles are masked by Pallas on writeback.
    if Np != N:
        x1 = jnp.pad(x1, ((0, Np - N), (0, 0)))
        sq1 = jnp.pad(sq1, ((0, Np - N), (0, 0)))
    if Mp != M:
        x2 = jnp.pad(x2, ((0, Mp - M), (0, 0)))
        sq2 = jnp.pad(sq2, ((0, 0), (0, Mp - M)))

    x2_rows = Mp if x2_resident else tn
    needed = _vmem_footprint(tm, tn, d_lane, x2_rows, out_itemsize)
    vmem_limit = int(min(max(needed + (4 << 20), 16 << 20), (phys * 7) // 8))

    x2_spec = (pl.BlockSpec((Mp, D), lambda i, j: (0, 0)) if x2_resident
               else pl.BlockSpec((tn, D), lambda i, j: (j, 0)))

    body = functools.partial(_gaussian_body,
                             neg_gamma=neg_gamma, sf2=sf2,
                             tn=tn, x2_resident=x2_resident)

    out = pl.pallas_call(
        body,
        out_shape=jax.ShapeDtypeStruct((N, M), out_dtype),
        grid_spec=pltpu.PrefetchScalarGridSpec(
            num_scalar_prefetch=0,
            grid=(grid_m, grid_n),
            in_specs=[
                pl.BlockSpec((tm, 1), lambda i, j: (i, 0)),   # ||x1||^2 column
                pl.BlockSpec((1, tn), lambda i, j: (0, j)),   # ||x2||^2 row
                pl.BlockSpec((tm, D), lambda i, j: (i, 0)),   # x1 row tile
                x2_spec,                                      # x2 (tile or resident)
            ],
            out_specs=pl.BlockSpec((tm, tn), lambda i, j: (i, j)),
        ),
        compiler_params=pltpu.CompilerParams(
            dimension_semantics=("parallel", "parallel"),
            vmem_limit_bytes=vmem_limit),
    )(sq1, sq2, x1, x2)

    return out


if __name__ == "__main__":
    # Module parameters (python scalars handed to __init__).
    length_scale = 1.5
    sigma_f = 0.8

    key = jax.random.PRNGKey(0)
    k1, k2, k3, k4 = jax.random.split(key, 4)

    # Main shapes.
    N, M, D = 128, 256, 32
    x1 = jax.random.normal(k1, (N, D), dtype=jnp.float32)
    x2 = jax.random.normal(k2, (M, D), dtype=jnp.float32)

    # forward(x1)          -> x2 = x1 path
    # forward(x1, x2)      -> explicit-x2 path
    K_self = gaussian_kernel(x1, None, length_scale, sigma_f)
    K_cross = gaussian_kernel(x1, x2, length_scale, sigma_f)

    # Ragged shapes + >1 grid tiles: exercises edge-masked output writeback and
    # the VMEM-resident x2 slicing path.
    a = jax.random.normal(k3, (100, 20), dtype=jnp.float32)
    b = jax.random.normal(k4, (200, 20), dtype=jnp.float32)
    K_rag = gaussian_kernel(a, b, length_scale, sigma_f, tm=64, tn=128)

    jax.block_until_ready((K_self, K_cross, K_rag))

    # Plain-JAX reference (same math as (torch.cdist / ls)**2 formula).
    def ref(p, q):
        sq = jnp.sum((p[:, None, :] - q[None, :, :]) ** 2, axis=-1)
        return sigma_f ** 2 * jnp.exp(-sq / (2.0 * length_scale ** 2))

    assert K_self.shape == (N, N)
    assert K_cross.shape == (N, M)
    assert K_rag.shape == (100, 200)
    assert jnp.allclose(K_self, ref(x1, x1), atol=1e-5, rtol=1e-5)
    assert jnp.allclose(K_cross, ref(x1, x2), atol=1e-5, rtol=1e-5)
    assert jnp.allclose(K_rag, ref(a, b), atol=1e-5, rtol=1e-5)

    print("KERNEL_OK")
</pallas_src>

<mosaic_0001>
module attributes {stable_mosaic.version = 11 : i64} {
  func.func @_gaussian_body(%arg0: i32, %arg1: i32, %arg2: memref<128x1xf32, #tpu.memory_space<vmem>>, %arg3: memref<1x128xf32, #tpu.memory_space<vmem>>, %arg4: memref<128x32xf32, #tpu.memory_space<vmem>>, %arg5: memref<128x32xf32, #tpu.memory_space<vmem>>, %arg6: memref<128x128xf32, #tpu.memory_space<vmem>>) attributes {dimension_semantics = [#tpu.dimension_semantics<parallel>, #tpu.dimension_semantics<parallel>], iteration_bounds = array<i64: 1, 1>, scalar_prefetch = 0 : i64, scratch_operands = 0 : i64, tpu.core_type = #tpu.core_type<tc>, window_params = [{transform_indices = @transform_0, window_bounds = array<i64: 128, 1>}, {transform_indices = @transform_1, window_bounds = array<i64: 1, 128>}, {transform_indices = @transform_2, window_bounds = array<i64: 128, 32>}, {pipeline_mode = #tpu.pipeline_mode<synchronous>, transform_indices = @transform_3, window_bounds = array<i64: 128, 32>}, {transform_indices = @transform_4, window_bounds = array<i64: 128, 128>}]} {
    %c0 = arith.constant 0 : index
    %c0_0 = arith.constant 0 : index
    %0 = vector.load %arg4[%c0, %c0_0] : memref<128x32xf32, #tpu.memory_space<vmem>>, vector<128x32xf32>
    %c128_i32 = arith.constant 128 : i32
    %1 = arith.muli %arg1, %c128_i32 : i32
    %2 = tpu.assume_multiple %1, 128 : i32
    %3 = arith.index_cast %2 : i32 to index
    %c0_1 = arith.constant 0 : index
    %4 = vector.load %arg5[%3, %c0_1] : memref<128x32xf32, #tpu.memory_space<vmem>>, vector<128x32xf32>
    %cst = arith.constant dense<0.000000e+00> : vector<128x128xf32>
    %5 = tpu.matmul %0, %4, %cst {dimension_numbers = #tpu.dot_dimension_numbers<[1], [1], [0], [0], [0, 0, 1, 0], [], []>} : vector<128x32xf32>, vector<128x32xf32>, vector<128x128xf32> -> vector<128x128xf32>
    %c0_2 = arith.constant 0 : index
    %c0_3 = arith.constant 0 : index
    %6 = vector.load %arg2[%c0_2, %c0_3] : memref<128x1xf32, #tpu.memory_space<vmem>>, vector<128x1xf32>
    %c0_4 = arith.constant 0 : index
    %c0_5 = arith.constant 0 : index
    %7 = vector.load %arg3[%c0_4, %c0_5] : memref<1x128xf32, #tpu.memory_space<vmem>>, vector<1x128xf32>
    %8 = vector.broadcast %6 : vector<128x1xf32> to vector<128x128xf32>
    %9 = vector.broadcast %7 : vector<1x128xf32> to vector<128x128xf32>
    %10 = arith.addf %8, %9 : vector<128x128xf32>
    %cst_6 = arith.constant 2.000000e+00 : f32
    %11 = vector.broadcast %cst_6 : f32 to vector<128x128xf32>
    %12 = arith.mulf %11, %5 : vector<128x128xf32>
    %13 = arith.subf %10, %12 : vector<128x128xf32>
    %cst_7 = arith.constant 0.000000e+00 : f32
    %14 = vector.broadcast %cst_7 : f32 to vector<128x128xf32>
    %15 = arith.maximumf %13, %14 : vector<128x128xf32>
    %cst_8 = arith.constant -0.222222224 : f32
    %16 = vector.broadcast %cst_8 : f32 to vector<128x128xf32>
    %17 = arith.mulf %15, %16 : vector<128x128xf32>
    %18 = math.exp %17 : vector<128x128xf32>
    %cst_9 = arith.constant 6.400000e-01 : f32
    %19 = vector.broadcast %cst_9 : f32 to vector<128x128xf32>
    %20 = arith.mulf %19, %18 : vector<128x128xf32>
    %c0_10 = arith.constant 0 : index
    %c0_11 = arith.constant 0 : index
    %21 = vector.load %arg6[%c0_10, %c0_11] : memref<128x128xf32, #tpu.memory_space<vmem>>, vector<128x128xf32>
    tpu.vector_store %arg6[%c0_10, %c0_11], %20 {strides = array<i32>} : memref<128x128xf32, #tpu.memory_space<vmem>>, vector<128x128xf32>,
    return
  }
  func.func @transform_0(%arg0: i32, %arg1: i32) -> (i32, i32) {
    %c0_i32 = arith.constant 0 : i32
    %c0_i32_0 = arith.constant 0 : i32
    return %arg0, %c0_i32 : i32, i32
  }
  func.func @transform_1(%arg0: i32, %arg1: i32) -> (i32, i32) {
    %c0_i32 = arith.constant 0 : i32
    %c0_i32_0 = arith.constant 0 : i32
    return %c0_i32, %arg1 : i32, i32
  }
  func.func @transform_2(%arg0: i32, %arg1: i32) -> (i32, i32) {
    %c0_i32 = arith.constant 0 : i32
    %c0_i32_0 = arith.constant 0 : i32
    return %arg0, %c0_i32 : i32, i32
  }
  func.func @transform_3(%arg0: i32, %arg1: i32) -> (i32, i32) {
    %c0_i32 = arith.constant 0 : i32
    %c0_i32_0 = arith.constant 0 : i32
    %c0_i32_1 = arith.constant 0 : i32
    return %c0_i32, %c0_i32_0 : i32, i32
  }
  func.func @transform_4(%arg0: i32, %arg1: i32) -> (i32, i32) {
    %c0_i32 = arith.constant 0 : i32
    return %arg0, %arg1 : i32, i32
  }
}

</mosaic_0001>

<llo_original>
// kernel: tpu_custom_call.1
$region0: #{tpu_custom_call.1}
  #allocation0 [shape = 'u32[]', space=smem, size = 0x4, offset = 0x4, fixed_abs, tag = 'smem constant byte address 0x4 - core index']
  #allocation1 [shape = 'u32[144,128]{1,0:T(1,128)}', space=vmem, size = 0x12000, scoped, tag = 'internal scratch']
  %s0 = inlined_call_operand.vmem [shape: f32[128,1], index: 0, kind: input, shape index: {}]
  %s1 = inlined_call_operand.vmem [shape: f32[1,128], index: 1, kind: input, shape index: {}]
  %s2 = inlined_call_operand.vmem [shape: f32[128,32], index: 2, kind: input, shape index: {}]
  %s3 = inlined_call_operand.vmem [shape: f32[128,32], index: 3, kind: input, shape index: {}]
  %s4 = inlined_call_operand.hbm [shape: f32[128,128], index: 4, kind: output, shape index: {}]
  %s5 = sld [smem:[#allocation0]]
  $region26: #{tpu_custom_call.1} parent=0
    _
  %s7 = ssub.s32 1, %s5
  %s8 = scalar_select 0, %s7, %s5
  $region1: #{tpu_custom_call.1} parent=0
    #allocation2 [shape = 'u8[65536]{0}', space=vmem, size = 0x10000, scoped, tag = 'output window, operand 0, single buffered']
    #allocation3 [shape = 's32[1]{0}', space=sflag, size = 0x4, scoped, tag = 'scoped memory for tpu_custom_call.1']
    %9 = vsyncpa [#allocation3], 0
    // Predicated region
    $region2: #{tpu_custom_call.1} parent=1 // pred_check
      _
    $region3: #{tpu_custom_call.1} parent=1 // pred_check_branch
      %11 = sbr.rel (0) target = $region5
    $region4: #{tpu_custom_call.1} parent=1 // pred_region
      _
    $region5: #{tpu_custom_call.1} parent=1 // pred_fallthru
      _
    // Predicated region
    $region6: #{tpu_custom_call.1} parent=1 // pred_check
      _
    $region7: #{tpu_custom_call.1} parent=1 // pred_check_branch
      %13 = sbr.rel (0) target = $region9
    $region8: #{tpu_custom_call.1} parent=1 // pred_region
      _
    $region9: #{tpu_custom_call.1} parent=1 // pred_fallthru
      _
    // Predicated region
    $region10: #{tpu_custom_call.1} parent=1 // pred_check
      _
    $region11: #{tpu_custom_call.1} parent=1 // pred_check_branch
      %15 = sbr.rel (0) target = $region13
    $region12: #{tpu_custom_call.1} parent=1 // pred_region
      _
    $region13: #{tpu_custom_call.1} parent=1 // pred_fallthru
      _
    // Predicated region
    $region14: #{tpu_custom_call.1} parent=1 // pred_check
      _
    $region15: #{tpu_custom_call.1} parent=1 // pred_check_branch
      %17 = sbr.rel (0) target = $region17
    $region16: #{tpu_custom_call.1} parent=1 // pred_region
      _
    $region17: #{tpu_custom_call.1} parent=1 // pred_fallthru
      _
    %v18 = vld [vmem:[%s2] sm:$0xff]
    %v19 = vld [vmem:[%s2 + $0x8] sm:$0xff]
    %v20 = vld [vmem:[%s2 + $0x10] sm:$0xff]
    %v21 = vld [vmem:[%s2 + $0x18] sm:$0xff]
    %v22 = vld [vmem:[%s2 + $0x20] sm:$0xff]
    %v23 = vld [vmem:[%s2 + $0x28] sm:$0xff]
    %v24 = vld [vmem:[%s2 + $0x30] sm:$0xff]
    %v25 = vld [vmem:[%s2 + $0x38] sm:$0xff]
    %v26 = vld [vmem:[%s2 + $0x40] sm:$0xff]
    %v27 = vld [vmem:[%s2 + $0x48] sm:$0xff]
    %v28 = vld [vmem:[%s2 + $0x50] sm:$0xff]
    %v29 = vld [vmem:[%s2 + $0x58] sm:$0xff]
    %v30 = vld [vmem:[%s2 + $0x60] sm:$0xff]
    %v31 = vld [vmem:[%s2 + $0x68] sm:$0xff]
    %v32 = vld [vmem:[%s2 + $0x70] sm:$0xff]
    %v33 = vld [vmem:[%s2 + $0x78] sm:$0xff]
    %s34 = smul.u32 0, 128
    %s35 = scalar_lea.vmem %s3, %s34
    %v36 = vld [vmem:[%s35] sm:$0xff]
    %v37 = vld [vmem:[%s35 + $0x8] sm:$0xff]
    %v38 = vld [vmem:[%s35 + $0x10] sm:$0xff]
    %v39 = vld [vmem:[%s35 + $0x18] sm:$0xff]
    %v40 = vld [vmem:[%s35 + $0x20] sm:$0xff]
    %v41 = vld [vmem:[%s35 + $0x28] sm:$0xff]
    %v42 = vld [vmem:[%s35 + $0x30] sm:$0xff]
    %v43 = vld [vmem:[%s35 + $0x38] sm:$0xff]
    %v44 = vld [vmem:[%s35 + $0x40] sm:$0xff]
    %v45 = vld [vmem:[%s35 + $0x48] sm:$0xff]
    %v46 = vld [vmem:[%s35 + $0x50] sm:$0xff]
    %v47 = vld [vmem:[%s35 + $0x58] sm:$0xff]
    %v48 = vld [vmem:[%s35 + $0x60] sm:$0xff]
    %v49 = vld [vmem:[%s35 + $0x68] sm:$0xff]
    %v50 = vld [vmem:[%s35 + $0x70] sm:$0xff]
    %v51 = vld [vmem:[%s35 + $0x78] sm:$0xff]
    %vm52 = vcmask 261120
    %v54 = vsel %vm52, %v18, 0
    %v57 = vsel %vm52, %v19, 0
    %v60 = vsel %vm52, %v20, 0
    %v63 = vsel %vm52, %v21, 0
    %v66 = vsel %vm52, %v22, 0
    %v69 = vsel %vm52, %v23, 0
    %v72 = vsel %vm52, %v24, 0
    %v75 = vsel %vm52, %v25, 0
    %v78 = vsel %vm52, %v26, 0
    %v81 = vsel %vm52, %v27, 0
    %v84 = vsel %vm52, %v28, 0
    %v87 = vsel %vm52, %v29, 0
    %v90 = vsel %vm52, %v30, 0
    %v93 = vsel %vm52, %v31, 0
    %v96 = vsel %vm52, %v32, 0
    %v99 = vsel %vm52, %v33, 0
    %v102 = vsel %vm52, %v36, 0
    %v105 = vsel %vm52, %v37, 0
    %v108 = vsel %vm52, %v38, 0
    %v111 = vsel %vm52, %v39, 0
    %v114 = vsel %vm52, %v40, 0
    %v117 = vsel %vm52, %v41, 0
    %v120 = vsel %vm52, %v42, 0
    %v123 = vsel %vm52, %v43, 0
    %v126 = vsel %vm52, %v44, 0
    %v129 = vsel %vm52, %v45, 0
    %v132 = vsel %vm52, %v46, 0
    %v135 = vsel %vm52, %v47, 0
    %v138 = vsel %vm52, %v48, 0
    %v141 = vsel %vm52, %v49, 0
    %v144 = vsel %vm52, %v50, 0
    %v147 = vsel %vm52, %v51, 0
    %149 = vmatprep.subr.mxu0 0.0
    %150 = vmatpush1.xpose.msra.mxu0 %v147
    %151 = vmatprep.subr.mxu0 0.0
    %152 = vmatpush1.xpose.msra.mxu0 %v144
    %153 = vmatprep.subr.mxu0 0.0
    %154 = vmatpush1.xpose.msra.mxu0 %v141
    %155 = vmatprep.subr.mxu0 0.0
    %156 = vmatpush1.xpose.msra.mxu0 %v138
    %157 = vmatprep.subr.mxu0 0.0
    %158 = vmatpush1.xpose.msra.mxu0 %v135
    %159 = vmatprep.subr.mxu0 0.0
    %160 = vmatpush1.xpose.msra.mxu0 %v132
    %161 = vmatprep.subr.mxu0 0.0
    %162 = vmatpush1.xpose.msra.mxu0 %v129
    %163 = vmatprep.subr.mxu0 0.0
    %164 = vmatpush1.xpose.msra.mxu0 %v126
    %165 = vmatprep.subr.mxu0 0.0
    %166 = vmatpush1.xpose.msra.mxu0 %v123
    %167 = vmatprep.subr.mxu0 0.0
    %168 = vmatpush1.xpose.msra.mxu0 %v120
    %169 = vmatprep.subr.mxu0 0.0
    %170 = vmatpush1.xpose.msra.mxu0 %v117
    %171 = vmatprep.subr.mxu0 0.0
    %172 = vmatpush1.xpose.msra.mxu0 %v114
    %173 = vmatprep.subr.mxu0 0.0
    %174 = vmatpush1.xpose.msra.mxu0 %v111
    %175 = vmatprep.subr.mxu0 0.0
    %176 = vmatpush1.xpose.msra.mxu0 %v108
    %177 = vmatprep.subr.mxu0 0.0
    %178 = vmatpush1.xpose.msra.mxu0 %v105
    %179 = vmatprep.subr.mxu0 0.0
    %180 = vmatpush1.xpose.msra.mxu0 %v102
    %181 = vmatprep.subr.mxu0 0.0
    %182 = vmatpush2.xpose.msra.mxu0 0.0
    %183 = vmatprep.subr.mxu0 0.0
    %184 = vmatpush2.xpose.msra.mxu0 0.0
    %185 = vmatprep.subr.mxu0 0.0
    %186 = vmatpush2.xpose.msra.mxu0 0.0
    %187 = vmatprep.subr.mxu0 0.0
    %188 = vmatpush2.xpose.msra.mxu0 0.0
    %189 = vmatprep.subr.mxu0 0.0
    %190 = vmatpush2.xpose.msra.mxu0 0.0
    %191 = vmatprep.subr.mxu0 0.0
    %192 = vmatpush2.xpose.msra.mxu0 0.0
    %193 = vmatprep.subr.mxu0 0.0
    %194 = vmatpush2.xpose.msra.mxu0 0.0
    %195 = vmatprep.subr.mxu0 0.0
    %196 = vmatpush2.xpose.msra.mxu0 0.0
    %197 = vmatprep.subr.mxu0 0.0
    %198 = vmatpush2.xpose.msra.mxu0 0.0
    %199 = vmatprep.subr.mxu0 0.0
    %200 = vmatpush2.xpose.msra.mxu0 0.0
    %201 = vmatprep.subr.mxu0 0.0
    %202 = vmatpush2.xpose.msra.mxu0 0.0
    %203 = vmatprep.subr.mxu0 0.0
    %204 = vmatpush2.xpose.msra.mxu0 0.0
    %205 = vmatprep.subr.mxu0 0.0
    %206 = vmatpush2.xpose.msra.mxu0 0.0
    %207 = vmatprep.subr.mxu0 0.0
    %208 = vmatpush2.xpose.msra.mxu0 0.0
    %209 = vmatprep.subr.mxu0 0.0
    %210 = vmatpush2.xpose.msra.mxu0 0.0
    %211 = vmatprep.subr.mxu0 0.0
    %212 = vmatpush2.xpose.msra.mxu0 0.0
    %213 = vmatprep.mubr.f32.mxu0 0.0
    %214 = vmatmul.mubr.f32.gmra.mxu0 %v54
    %v215 = vpop.f32.mrf.mxu0
    %v216 = vadd.f32 0.0, %v215
    %v217 = vpop.f32.mrf.mxu0
    %218 = vmatprep.mubr.f32.mxu0 0.0
    %219 = vmatmul.mubr.f32.gmra.mxu0 %v57
    %v220 = vpop.f32.mrf.mxu0
    %v221 = vadd.f32 0.0, %v220
    %v222 = vpop.f32.mrf.mxu0
    %223 = vmatprep.mubr.f32.mxu0 0.0
    %224 = vmatmul.mubr.f32.gmra.mxu0 %v60
    %v225 = vpop.f32.mrf.mxu0
    %v226 = vadd.f32 0.0, %v225
    %v227 = vpop.f32.mrf.mxu0
    %228 = vmatprep.mubr.f32.mxu0 0.0
    %229 = vmatmul.mubr.f32.gmra.mxu0 %v63
    %v230 = vpop.f32.mrf.mxu0
    %v231 = vadd.f32 0.0, %v230
    %v232 = vpop.f32.mrf.mxu0
    %233 = vmatprep.mubr.f32.mxu0 0.0
    %234 = vmatmul.mubr.f32.gmra.mxu0 %v66
    %v235 = vpop.f32.mrf.mxu0
    %v236 = vadd.f32 0.0, %v235
    %v237 = vpop.f32.mrf.mxu0
    %238 = vmatprep.mubr.f32.mxu0 0.0
    %239 = vmatmul.mubr.f32.gmra.mxu0 %v69
    %v240 = vpop.f32.mrf.mxu0
    %v241 = vadd.f32 0.0, %v240
    %v242 = vpop.f32.mrf.mxu0
    %243 = vmatprep.mubr.f32.mxu0 0.0
    %244 = vmatmul.mubr.f32.gmra.mxu0 %v72
    %v245 = vpop.f32.mrf.mxu0
    %v246 = vadd.f32 0.0, %v245
    %v247 = vpop.f32.mrf.mxu0
    %248 = vmatprep.mubr.f32.mxu0 0.0
    %249 = vmatmul.mubr.f32.gmra.mxu0 %v75
    %v250 = vpop.f32.mrf.mxu0
    %v251 = vadd.f32 0.0, %v250
    %v252 = vpop.f32.mrf.mxu0
    %253 = vmatprep.mubr.f32.mxu0 0.0
    %254 = vmatmul.mubr.f32.gmra.mxu0 %v78
    %v255 = vpop.f32.mrf.mxu0
    %v256 = vadd.f32 0.0, %v255
    %v257 = vpop.f32.mrf.mxu0
    %258 = vmatprep.mubr.f32.mxu0 0.0
    %259 = vmatmul.mubr.f32.gmra.mxu0 %v81
    %v260 = vpop.f32.mrf.mxu0
    %v261 = vadd.f32 0.0, %v260
    %v262 = vpop.f32.mrf.mxu0
    %263 = vmatprep.mubr.f32.mxu0 0.0
    %264 = vmatmul.mubr.f32.gmra.mxu0 %v84
    %v265 = vpop.f32.mrf.mxu0
    %v266 = vadd.f32 0.0, %v265
    %v267 = vpop.f32.mrf.mxu0
    %268 = vmatprep.mubr.f32.mxu0 0.0
    %269 = vmatmul.mubr.f32.gmra.mxu0 %v87
    %v270 = vpop.f32.mrf.mxu0
    %v271 = vadd.f32 0.0, %v270
    %v272 = vpop.f32.mrf.mxu0
    %273 = vmatprep.mubr.f32.mxu0 0.0
    %274 = vmatmul.mubr.f32.gmra.mxu0 %v90
    %v275 = vpop.f32.mrf.mxu0
    %v276 = vadd.f32 0.0, %v275
    %v277 = vpop.f32.mrf.mxu0
    %278 = vmatprep.mubr.f32.mxu0 0.0
    %279 = vmatmul.mubr.f32.gmra.mxu0 %v93
    %v280 = vpop.f32.mrf.mxu0
    %v281 = vadd.f32 0.0, %v280
    %v282 = vpop.f32.mrf.mxu0
    %283 = vmatprep.mubr.f32.mxu0 0.0
    %284 = vmatmul.mubr.f32.gmra.mxu0 %v96
    %v285 = vpop.f32.mrf.mxu0
    %v286 = vadd.f32 0.0, %v285
    %v287 = vpop.f32.mrf.mxu0
    %288 = vmatprep.mubr.f32.mxu0 0.0
    %289 = vmatmul.mubr.f32.gmra.mxu0 %v99
    %v290 = vpop.f32.mrf.mxu0
    %v291 = vadd.f32 0.0, %v290
    %v292 = vpop.f32.mrf.mxu0
    %293 = vdwg.mxu0
    %v294 = vld [vmem:[%s0] sm:$0xff]
    %v295 = vld [vmem:[%s0 + $0x8] sm:$0xff]
    %v296 = vld [vmem:[%s0 + $0x10] sm:$0xff]
    %v297 = vld [vmem:[%s0 + $0x18] sm:$0xff]
    %v298 = vld [vmem:[%s0 + $0x20] sm:$0xff]
    %v299 = vld [vmem:[%s0 + $0x28] sm:$0xff]
    %v300 = vld [vmem:[%s0 + $0x30] sm:$0xff]
    %v301 = vld [vmem:[%s0 + $0x38] sm:$0xff]
    %v302 = vld [vmem:[%s0 + $0x40] sm:$0xff]
    %v303 = vld [vmem:[%s0 + $0x48] sm:$0xff]
    %v304 = vld [vmem:[%s0 + $0x50] sm:$0xff]
    %v305 = vld [vmem:[%s0 + $0x58] sm:$0xff]
    %v306 = vld [vmem:[%s0 + $0x60] sm:$0xff]
    %v307 = vld [vmem:[%s0 + $0x68] sm:$0xff]
    %v308 = vld [vmem:[%s0 + $0x70] sm:$0xff]
    %v309 = vld [vmem:[%s0 + $0x78] sm:$0xff]
    %v310 = vld [vmem:[%s1] sm:$0x1]
    %312 = vset.pattern.permute.xlu0 0
    %313 = vperm.xlu0 %312, %v294
    %v314 = vpop.permute.xlu0 %313
    %317 = vset.pattern.permute.xlu0 0
    %318 = vperm.xlu0 %317, %v295
    %v319 = vpop.permute.xlu0 %318
    %322 = vset.pattern.permute.xlu0 0
    %323 = vperm.xlu0 %322, %v296
    %v324 = vpop.permute.xlu0 %323
    %327 = vset.pattern.permute.xlu0 0
    %328 = vperm.xlu0 %327, %v297
    %v329 = vpop.permute.xlu0 %328
    %332 = vset.pattern.permute.xlu0 0
    %333 = vperm.xlu0 %332, %v298
    %v334 = vpop.permute.xlu0 %333
    %337 = vset.pattern.permute.xlu0 0
    %338 = vperm.xlu0 %337, %v299
    %v339 = vpop.permute.xlu0 %338
    %342 = vset.pattern.permute.xlu0 0
    %343 = vperm.xlu0 %342, %v300
    %v344 = vpop.permute.xlu0 %343
    %347 = vset.pattern.permute.xlu0 0
    %348 = vperm.xlu0 %347, %v301
    %v349 = vpop.permute.xlu0 %348
    %352 = vset.pattern.permute.xlu0 0
    %353 = vperm.xlu0 %352, %v302
    %v354 = vpop.permute.xlu0 %353
    %357 = vset.pattern.permute.xlu0 0
    %358 = vperm.xlu0 %357, %v303
    %v359 = vpop.permute.xlu0 %358
    %362 = vset.pattern.permute.xlu0 0
    %363 = vperm.xlu0 %362, %v304
    %v364 = vpop.permute.xlu0 %363
    %367 = vset.pattern.permute.xlu0 0
    %368 = vperm.xlu0 %367, %v305
    %v369 = vpop.permute.xlu0 %368
    %372 = vset.pattern.permute.xlu0 0
    %373 = vperm.xlu0 %372, %v306
    %v374 = vpop.permute.xlu0 %373
    %377 = vset.pattern.permute.xlu0 0
    %378 = vperm.xlu0 %377, %v307
    %v379 = vpop.permute.xlu0 %378
    %382 = vset.pattern.permute.xlu0 0
    %383 = vperm.xlu0 %382, %v308
    %v384 = vpop.permute.xlu0 %383
    %387 = vset.pattern.permute.xlu0 0
    %388 = vperm.xlu0 %387, %v309
    %v389 = vpop.permute.xlu0 %388
    %v392 = vlaneseq
    %v393 = vshrl.u32 %v392, 7
    %v394 = vsub.s32 0, %v393
    %v395 = vrot.slane %v310, %v394
    %v397 = vadd.f32 %v314, %v395
    %v398 = vadd.f32 %v319, %v395
    %v399 = vadd.f32 %v324, %v395
    %v400 = vadd.f32 %v329, %v395
    %v401 = vadd.f32 %v334, %v395
    %v402 = vadd.f32 %v339, %v395
    %v403 = vadd.f32 %v344, %v395
    %v404 = vadd.f32 %v349, %v395
    %v405 = vadd.f32 %v354, %v395
    %v406 = vadd.f32 %v359, %v395
    %v407 = vadd.f32 %v364, %v395
    %v408 = vadd.f32 %v369, %v395
    %v409 = vadd.f32 %v374, %v395
    %v410 = vadd.f32 %v379, %v395
    %v411 = vadd.f32 %v384, %v395
    %v412 = vadd.f32 %v389, %v395
    %v413 = vmul.f32 %v216, 2.0
    %v414 = vmul.f32 %v221, 2.0
    %v415 = vmul.f32 %v226, 2.0
    %v416 = vmul.f32 %v231, 2.0
    %v417 = vmul.f32 %v236, 2.0
    %v418 = vmul.f32 %v241, 2.0
    %v419 = vmul.f32 %v246, 2.0
    %v420 = vmul.f32 %v251, 2.0
    %v421 = vmul.f32 %v256, 2.0
    %v422 = vmul.f32 %v261, 2.0
    %v423 = vmul.f32 %v266, 2.0
    %v424 = vmul.f32 %v271, 2.0
    %v425 = vmul.f32 %v276, 2.0
    %v426 = vmul.f32 %v281, 2.0
    %v427 = vmul.f32 %v286, 2.0
    %v428 = vmul.f32 %v291, 2.0
    %v429 = vsub.f32 %v397, %v413
    %v430 = vsub.f32 %v398, %v414
    %v431 = vsub.f32 %v399, %v415
    %v432 = vsub.f32 %v400, %v416
    %v433 = vsub.f32 %v401, %v417
    %v434 = vsub.f32 %v402, %v418
    %v435 = vsub.f32 %v403, %v419
    %v436 = vsub.f32 %v404, %v420
    %v437 = vsub.f32 %v405, %v421
    %v438 = vsub.f32 %v406, %v422
    %v439 = vsub.f32 %v407, %v423
    %v440 = vsub.f32 %v408, %v424
    %v441 = vsub.f32 %v409, %v425
    %v442 = vsub.f32 %v410, %v426
    %v443 = vsub.f32 %v411, %v427
    %v444 = vsub.f32 %v412, %v428
    %v445 = vmax.f32 %v429, 0.0
    %v446 = vmax.f32 %v430, 0.0
    %v447 = vmax.f32 %v431, 0.0
    %v448 = vmax.f32 %v432, 0.0
    %v449 = vmax.f32 %v433, 0.0
    %v450 = vmax.f32 %v434, 0.0
    %v451 = vmax.f32 %v435, 0.0
    %v452 = vmax.f32 %v436, 0.0
    %v453 = vmax.f32 %v437, 0.0
    %v454 = vmax.f32 %v438, 0.0
    %v455 = vmax.f32 %v439, 0.0
    %v456 = vmax.f32 %v440, 0.0
    %v457 = vmax.f32 %v441, 0.0
    %v458 = vmax.f32 %v442, 0.0
    %v459 = vmax.f32 %v443, 0.0
    %v460 = vmax.f32 %v444, 0.0
    %v461 = vmul.f32 %v445, -0.22222222
    %v462 = vmul.f32 %v446, -0.22222222
    %v463 = vmul.f32 %v447, -0.22222222
    %v464 = vmul.f32 %v448, -0.22222222
    %v465 = vmul.f32 %v449, -0.22222222
    %v466 = vmul.f32 %v450, -0.22222222
    %v467 = vmul.f32 %v451, -0.22222222
    %v468 = vmul.f32 %v452, -0.22222222
    %v469 = vmul.f32 %v453, -0.22222222
    %v470 = vmul.f32 %v454, -0.22222222
    %v471 = vmul.f32 %v455, -0.22222222
    %v472 = vmul.f32 %v456, -0.22222222
    %v473 = vmul.f32 %v457, -0.22222222
    %v474 = vmul.f32 %v458, -0.22222222
    %v475 = vmul.f32 %v459, -0.22222222
    %v476 = vmul.f32 %v460, -0.22222222
    %v477 = vmul.f32 %v461, 1.442695
    %v478 = vpow.pop %v477
    %v479 = vmul.f32 %v462, 1.442695
    %v480 = vpow.pop %v479
    %v481 = vmul.f32 %v463, 1.442695
    %v482 = vpow.pop %v481
    %v483 = vmul.f32 %v464, 1.442695
    %v484 = vpow.pop %v483
    %v485 = vmul.f32 %v465, 1.442695
    %v486 = vpow.pop %v485
    %v487 = vmul.f32 %v466, 1.442695
    %v488 = vpow.pop %v487
    %v489 = vmul.f32 %v467, 1.442695
    %v490 = vpow.pop %v489
    %v491 = vmul.f32 %v468, 1.442695
    %v492 = vpow.pop %v491
    %v493 = vmul.f32 %v469, 1.442695
    %v494 = vpow.pop %v493
    %v495 = vmul.f32 %v470, 1.442695
    %v496 = vpow.pop %v495
    %v497 = vmul.f32 %v471, 1.442695
    %v498 = vpow.pop %v497
    %v499 = vmul.f32 %v472, 1.442695
    %v500 = vpow.pop %v499
    %v501 = vmul.f32 %v473, 1.442695
    %v502 = vpow.pop %v501
    %v503 = vmul.f32 %v474, 1.442695
    %v504 = vpow.pop %v503
    %v505 = vmul.f32 %v475, 1.442695
    %v506 = vpow.pop %v505
    %v507 = vmul.f32 %v476, 1.442695
    %v508 = vpow.pop %v507
    %v509 = vmul.f32 %v478, 0.64
    %v510 = vmul.f32 %v480, 0.64
    %v511 = vmul.f32 %v482, 0.64
    %v512 = vmul.f32 %v484, 0.64
    %v513 = vmul.f32 %v486, 0.64
    %v514 = vmul.f32 %v488, 0.64
    %v515 = vmul.f32 %v490, 0.64
    %v516 = vmul.f32 %v492, 0.64
    %v517 = vmul.f32 %v494, 0.64
    %v518 = vmul.f32 %v496, 0.64
    %v519 = vmul.f32 %v498, 0.64
    %v520 = vmul.f32 %v500, 0.64
    %v521 = vmul.f32 %v502, 0.64
    %v522 = vmul.f32 %v504, 0.64
    %v523 = vmul.f32 %v506, 0.64
    %v524 = vmul.f32 %v508, 0.64
    %525 = vst [vmem:[#allocation2] sm:$0xff] %v509
    %526 = vst [vmem:[#allocation2 + $0x8] sm:$0xff] %v510
    %527 = vst [vmem:[#allocation2 + $0x10] sm:$0xff] %v511
    %528 = vst [vmem:[#allocation2 + $0x18] sm:$0xff] %v512
    %529 = vst [vmem:[#allocation2 + $0x20] sm:$0xff] %v513
    %530 = vst [vmem:[#allocation2 + $0x28] sm:$0xff] %v514
    %531 = vst [vmem:[#allocation2 + $0x30] sm:$0xff] %v515
    %532 = vst [vmem:[#allocation2 + $0x38] sm:$0xff] %v516
    %533 = vst [vmem:[#allocation2 + $0x40] sm:$0xff] %v517
    %534 = vst [vmem:[#allocation2 + $0x48] sm:$0xff] %v518
    %535 = vst [vmem:[#allocation2 + $0x50] sm:$0xff] %v519
    %536 = vst [vmem:[#allocation2 + $0x58] sm:$0xff] %v520
    %537 = vst [vmem:[#allocation2 + $0x60] sm:$0xff] %v521
    %538 = vst [vmem:[#allocation2 + $0x68] sm:$0xff] %v522
    %539 = vst [vmem:[#allocation2 + $0x70] sm:$0xff] %v523
    %540 = vst [vmem:[#allocation2 + $0x78] sm:$0xff] %v524
    // Predicated region
    $region18: #{tpu_custom_call.1} parent=1 // pred_check
      _
    $region19: #{tpu_custom_call.1} parent=1 // pred_check_branch
      %542 = sbr.rel (0) target = $region21
    $region20: #{tpu_custom_call.1} parent=1 // pred_region
      %s544 = ssub.s32 2048, 2048
      %545 = vsyncadd [#allocation3], %s544
      %s546 = sshll.u32 [#allocation2], 4
      %s547 = int_to_ptr.vmem [resolvable:$true] %s546
      %552 = dma.vmem_to_hbm [thread:$0]  %s547, 2048, %s4, [#allocation3], 128, 128, 8
    $region21: #{tpu_custom_call.1} parent=1 // pred_fallthru
      _
    // Predicated region
    $region22: #{tpu_custom_call.1} parent=1 // pred_check
      _
    $region23: #{tpu_custom_call.1} parent=1 // pred_check_branch
      %554 = sbr.rel (0) target = $region25
    $region24: #{tpu_custom_call.1} parent=1 // pred_region
      %555 = dma.done [#allocation3], 2048
    $region25: #{tpu_custom_call.1} parent=1 // pred_fallthru
      _
    %556 = vsyncpa [#allocation3], 1

</llo_original>
